<compile_context>
chip_gen: v7x
topology: tpu7x:2x2x1
jax: 0.10.0
libtpu: 0.0.40
codegen_flags: <defaults>
</compile_context>

<pallas_src>
import functools

import jax
import jax.numpy as jnp
from jax.experimental import pallas as pl
from jax.experimental.pallas import tpu as pltpu

_LANES = 128


def _round_up(x, m):
    return ((x + m - 1) // m) * m


def _bmc_lse_kernel(scale_ref, pred_ref, tgt_ref, lse_ref, m_scr, l_scr,
                    *, block_cols, valid_cols, mask_cols):
    """One (row_tile, col_tile) step of the pairwise logsumexp.

    scale_ref: (1, 1)  f32 SMEM   -- -1 / (2 * noise_var)  (hoisted reciprocal)
    pred_ref:  (TM, 1) f32 VMEM   -- row tile of predictions (sublane axis)
    tgt_ref:   (1, TN) f32 VMEM   -- lane-dense column tile of targets
    lse_ref:   (TM, 128) f32 VMEM -- per-row logsumexp, broadcast over lanes
    m_scr, l_scr: (TM, 1) f32     -- online-softmax running max / running sum
    """
    j = pl.program_id(1)

    @pl.when(j == 0)
    def _init():
        m_scr[...] = jnp.full_like(m_scr, -jnp.inf)
        l_scr[...] = jnp.zeros_like(l_scr)

    scale = scale_ref[0, 0]                        # scalar, read once per step
    p = pred_ref[...]                              # (TM, 1)
    t = tgt_ref[...]                               # (1, TN) lane-dense
    diff = p - t                                   # (TM, TN) broadcast sub
    logits = (diff * diff) * scale                 # multiplies only, no divide

    if mask_cols:                                  # static: only if BN != B
        col = jax.lax.broadcasted_iota(jnp.int32, logits.shape, 1) + j * block_cols
        logits = jnp.where(col < valid_cols, logits, -jnp.inf)

    m_prev = m_scr[...]
    m_new = jnp.maximum(m_prev, jnp.max(logits, axis=-1, keepdims=True))
    alpha = jnp.exp(m_prev - m_new)
    l_scr[...] = alpha * l_scr[...] + jnp.sum(jnp.exp(logits - m_new),
                                              axis=-1, keepdims=True)
    m_scr[...] = m_new

    @pl.when(j == pl.num_programs(1) - 1)
    def _finalize():
        lse = m_scr[...] + jnp.log(l_scr[...])     # (TM, 1)
        lse_ref[...] = jnp.broadcast_to(lse, lse_ref.shape)


def bmc_loss_pallas(pred, target, noise_sigma, *, tm=None, tn=None):
    """pred, target: [B, 1] (or [B]) float arrays. noise_sigma: scalar."""
    pred = jnp.asarray(pred, jnp.float32).reshape(-1, 1)
    target = jnp.asarray(target, jnp.float32).reshape(-1, 1)
    B = pred.shape[0]

    sigma = jnp.asarray(noise_sigma, jnp.float32)
    noise_var = sigma * sigma
    two_nv = 2.0 * noise_var
    scale = jnp.reshape(-1.0 / two_nv, (1, 1))     # scalar reciprocal, once

    # Tile sizes: (8,128)-aligned, VMEM-friendly on v5e/v6e/v7x.
    TM = tm if tm is not None else min(256, _round_up(B, 8))
    TN = tn if tn is not None else min(512, _round_up(B, _LANES))
    BM = _round_up(B, TM)
    BN = _round_up(B, TN)
    grid = (BM // TM, BN // TN)
    mask_cols = BN != B

    pred_pad = jnp.pad(pred, ((0, BM - B), (0, 0)))
    tgt_row = jnp.pad(target.reshape(1, B), ((0, 0), (0, BN - B)))  # lane-dense

    kernel = functools.partial(_bmc_lse_kernel, block_cols=TN,
                               valid_cols=B, mask_cols=mask_cols)

    lse_out = pl.pallas_call(
        kernel,
        out_shape=jax.ShapeDtypeStruct((BM, _LANES), jnp.float32),
        grid_spec=pltpu.PrefetchScalarGridSpec(
            num_scalar_prefetch=0,
            grid=grid,
            in_specs=[
                pl.BlockSpec(memory_space=pltpu.MemorySpace.SMEM),   # scale
                pl.BlockSpec((TM, 1), lambda i, j: (i, 0)),          # pred rows
                pl.BlockSpec((1, TN), lambda i, j: (0, j)),          # target cols
            ],
            out_specs=pl.BlockSpec((TM, _LANES), lambda i, j: (i, 0)),
            scratch_shapes=[pltpu.VMEM((TM, 1), jnp.float32),        # running max
                            pltpu.VMEM((TM, 1), jnp.float32)],       # running sum
        ),
        compiler_params=pltpu.CompilerParams(
            dimension_semantics=("parallel", "arbitrary"),
            vmem_limit_bytes=32 * 1024 * 1024,
        ),
    )(scale, pred_pad, tgt_row)

    lse = lse_out[:B, 0]                 # drop padded rows, take lane 0
    d = (pred - target)[:, 0]
    # mean(lse - diag) * 2nv with diag = -(d^2)/(2nv) simplifies analytically.
    # TODO(synk): PyTorch detaches the trailing (2*noise_var) factor; forward
    # value is identical, but exact grads w.r.t. noise_sigma need a custom_vjp.
    return two_nv * jnp.mean(lse) + jnp.mean(d * d)


class BMCLossPallas:
    """Mirror of the PyTorch BMCLoss module (forward only)."""

    def __init__(self, init_noise_sigma):
        self.noise_sigma = jnp.asarray(init_noise_sigma, dtype=jnp.float32)

    def __call__(self, pred, target):
        return bmc_loss_pallas(pred, target, self.noise_sigma)


if __name__ == "__main__":
    def _ref_loss(pred, target, sigma):
        nv = jnp.asarray(sigma, jnp.float32) ** 2
        logits = -(pred - target.T) ** 2 / (2 * nv)
        lse = jax.scipy.special.logsumexp(logits, axis=-1)
        return jnp.mean(lse - jnp.diag(logits)) * (2 * nv)

    key = jax.random.PRNGKey(0)
    kp, kt, kp2, kt2 = jax.random.split(key, 4)

    # Small case matching the module's [batch, 1] convention.
    B = 8
    pred = jax.random.normal(kp, (B, 1), dtype=jnp.float32)
    target = jax.random.normal(kt, (B, 1), dtype=jnp.float32)

    loss_mod = BMCLossPallas(init_noise_sigma=1.0)
    loss = loss_mod(pred, target)
    jax.block_until_ready(loss)
    ref = _ref_loss(pred, target, loss_mod.noise_sigma)
    assert jnp.allclose(loss, ref, rtol=1e-4, atol=1e-4), (loss, ref)

    # Larger check exercising multi-tile grid, column masking and the
    # online-softmax accumulation across column tiles.
    B2 = 300
    pred2 = jax.random.normal(kp2, (B2, 1), dtype=jnp.float32)
    target2 = 2.0 * jax.random.normal(kt2, (B2, 1), dtype=jnp.float32)
    loss2 = bmc_loss_pallas(pred2, target2, 0.7, tm=64, tn=128)
    jax.block_until_ready(loss2)
    ref2 = _ref_loss(pred2, target2, 0.7)
    assert jnp.allclose(loss2, ref2, rtol=1e-4, atol=1e-4), (loss2, ref2)

    print("KERNEL_OK")
</pallas_src>

<mosaic_0001>
module attributes {stable_mosaic.version = 11 : i64} {
  func.func @_bmc_lse_kernel(%arg0: i32, %arg1: i32, %arg2: memref<1x1xf32, #tpu.memory_space<smem>>, %arg3: memref<8x1xf32, #tpu.memory_space<vmem>>, %arg4: memref<1x128xf32, #tpu.memory_space<vmem>>, %arg5: memref<8x128xf32, #tpu.memory_space<vmem>>, %arg6: memref<8x1xf32, #tpu.memory_space<vmem>>, %arg7: memref<8x1xf32, #tpu.memory_space<vmem>>) attributes {dimension_semantics = [#tpu.dimension_semantics<parallel>, #tpu.dimension_semantics<arbitrary>], iteration_bounds = array<i64: 1, 1>, scalar_prefetch = 0 : i64, scratch_operands = 2 : i64, tpu.core_type = #tpu.core_type<tc>, window_params = [{transform_indices = @transform_0, window_bounds = array<i64: 1, 1>}, {transform_indices = @transform_1, window_bounds = array<i64: 8, 1>}, {transform_indices = @transform_2, window_bounds = array<i64: 1, 128>}, {transform_indices = @transform_3, window_bounds = array<i64: 8, 128>}]} {
    %c0_i32 = arith.constant 0 : i32
    %0 = arith.cmpi eq, %arg1, %c0_i32 : i32
    %1 = arith.extui %0 : i1 to i32
    %c0_i32_0 = arith.constant 0 : i32
    %2 = arith.cmpi ne, %1, %c0_i32_0 : i32
    scf.if %2 {
      %cst_18 = arith.constant 0xFF800000 : f32
      %39 = vector.broadcast %cst_18 : f32 to vector<8x1xf32>
      %c0_19 = arith.constant 0 : index
      %c0_20 = arith.constant 0 : index
      %40 = vector.load %arg6[%c0_19, %c0_20] : memref<8x1xf32, #tpu.memory_space<vmem>>, vector<8x1xf32>
      tpu.vector_store %arg6[%c0_19, %c0_20], %39 {strides = array<i32>} : memref<8x1xf32, #tpu.memory_space<vmem>>, vector<8x1xf32>,
      %cst_21 = arith.constant 0.000000e+00 : f32
      %41 = vector.broadcast %cst_21 : f32 to vector<8x1xf32>
      %c0_22 = arith.constant 0 : index
      %c0_23 = arith.constant 0 : index
      %42 = vector.load %arg7[%c0_22, %c0_23] : memref<8x1xf32, #tpu.memory_space<vmem>>, vector<8x1xf32>
      tpu.vector_store %arg7[%c0_22, %c0_23], %41 {strides = array<i32>} : memref<8x1xf32, #tpu.memory_space<vmem>>, vector<8x1xf32>,
    } else {
    }
    %c0 = arith.constant 0 : index
    %c0_1 = arith.constant 0 : index
    %3 = memref.load %arg2[%c0, %c0_1] : memref<1x1xf32, #tpu.memory_space<smem>>
    %c0_2 = arith.constant 0 : index
    %c0_3 = arith.constant 0 : index
    %4 = vector.load %arg3[%c0_2, %c0_3] : memref<8x1xf32, #tpu.memory_space<vmem>>, vector<8x1xf32>
    %c0_4 = arith.constant 0 : index
    %c0_5 = arith.constant 0 : index
    %5 = vector.load %arg4[%c0_4, %c0_5] : memref<1x128xf32, #tpu.memory_space<vmem>>, vector<1x128xf32>
    %6 = vector.broadcast %4 : vector<8x1xf32> to vector<8x128xf32>
    %7 = vector.broadcast %5 : vector<1x128xf32> to vector<8x128xf32>
    %8 = arith.subf %6, %7 : vector<8x128xf32>
    %9 = arith.mulf %8, %8 : vector<8x128xf32>
    %10 = vector.broadcast %3 : f32 to vector<8x128xf32>
    %11 = arith.mulf %9, %10 : vector<8x128xf32>
    %12 = tpu.iota {dimensions = array<i32: 1>} : vector<8x128xi32>
    %c128_i32 = arith.constant 128 : i32
    %13 = arith.muli %arg1, %c128_i32 : i32
    %14 = vector.broadcast %13 : i32 to vector<8x128xi32>
    %15 = arith.addi %12, %14 : vector<8x128xi32>
    %c8_i32 = arith.constant 8 : i32
    %16 = vector.broadcast %c8_i32 : i32 to vector<8x128xi32>
    %17 = arith.cmpi slt, %15, %16 : vector<8x128xi32>
    %cst = arith.constant 0xFF800000 : f32
    %18 = vector.broadcast %cst : f32 to vector<8x128xf32>
    %19 = arith.select %17, %11, %18 : vector<8x128xi1>, vector<8x128xf32>
    %c0_6 = arith.constant 0 : index
    %c0_7 = arith.constant 0 : index
    %20 = vector.load %arg6[%c0_6, %c0_7] : memref<8x1xf32, #tpu.memory_space<vmem>>, vector<8x1xf32>
    %cst_8 = arith.constant dense<0xFF800000> : vector<8xf32>
    %21 = vector.multi_reduction <maximumf>, %19, %cst_8 [1] : vector<8x128xf32> to vector<8xf32>
    %22 = vector.shape_cast %21 : vector<8xf32> to vector<8x1xf32>
    %23 = arith.maximumf %20, %22 : vector<8x1xf32>
    %24 = arith.subf %20, %23 : vector<8x1xf32>
    %25 = math.exp %24 : vector<8x1xf32>
    %c0_9 = arith.constant 0 : index
    %c0_10 = arith.constant 0 : index
    %26 = vector.load %arg7[%c0_9, %c0_10] : memref<8x1xf32, #tpu.memory_space<vmem>>, vector<8x1xf32>
    %27 = arith.mulf %25, %26 : vector<8x1xf32>
    %28 = vector.broadcast %23 : vector<8x1xf32> to vector<8x128xf32>
    %29 = arith.subf %19, %28 : vector<8x128xf32>
    %30 = math.exp %29 : vector<8x128xf32>
    %cst_11 = arith.constant dense<0.000000e+00> : vector<8xf32>
    %31 = vector.multi_reduction <add>, %30, %cst_11 [1] : vector<8x128xf32> to vector<8xf32>
    %32 = vector.shape_cast %31 : vector<8xf32> to vector<8x1xf32>
    %33 = arith.addf %27, %32 : vector<8x1xf32>
    %c0_12 = arith.constant 0 : index
    %c0_13 = arith.constant 0 : index
    %34 = vector.load %arg7[%c0_12, %c0_13] : memref<8x1xf32, #tpu.memory_space<vmem>>, vector<8x1xf32>
    tpu.vector_store %arg7[%c0_12, %c0_13], %33 {strides = array<i32>} : memref<8x1xf32, #tpu.memory_space<vmem>>, vector<8x1xf32>,
    %c0_14 = arith.constant 0 : index
    %c0_15 = arith.constant 0 : index
    %35 = vector.load %arg6[%c0_14, %c0_15] : memref<8x1xf32, #tpu.memory_space<vmem>>, vector<8x1xf32>
    tpu.vector_store %arg6[%c0_14, %c0_15], %23 {strides = array<i32>} : memref<8x1xf32, #tpu.memory_space<vmem>>, vector<8x1xf32>,
    %c0_i32_16 = arith.constant 0 : i32
    %36 = arith.cmpi eq, %arg1, %c0_i32_16 : i32
    %37 = arith.extui %36 : i1 to i32
    %c0_i32_17 = arith.constant 0 : i32
    %38 = arith.cmpi ne, %37, %c0_i32_17 : i32
    scf.if %38 {
      %c0_18 = arith.constant 0 : index
      %c0_19 = arith.constant 0 : index
      %39 = vector.load %arg6[%c0_18, %c0_19] : memref<8x1xf32, #tpu.memory_space<vmem>>, vector<8x1xf32>
      %c0_20 = arith.constant 0 : index
      %c0_21 = arith.constant 0 : index
      %40 = vector.load %arg7[%c0_20, %c0_21] : memref<8x1xf32, #tpu.memory_space<vmem>>, vector<8x1xf32>
      %41 = math.log %40 : vector<8x1xf32>
      %42 = arith.addf %39, %41 : vector<8x1xf32>
      %43 = vector.shape_cast %42 : vector<8x1xf32> to vector<8x1xf32>
      %44 = vector.broadcast %43 : vector<8x1xf32> to vector<8x128xf32>
      %c0_22 = arith.constant 0 : index
      %c0_23 = arith.constant 0 : index
      %45 = vector.load %arg5[%c0_22, %c0_23] : memref<8x128xf32, #tpu.memory_space<vmem>>, vector<8x128xf32>
      tpu.vector_store %arg5[%c0_22, %c0_23], %44 {strides = array<i32>} : memref<8x128xf32, #tpu.memory_space<vmem>>, vector<8x128xf32>,
    } else {
    }
    return
  }
  func.func @transform_0(%arg0: i32, %arg1: i32) -> (i32, i32) {
    %c0_i32 = arith.constant 0 : i32
    %c0_i32_0 = arith.constant 0 : i32
    %c0_i32_1 = arith.constant 0 : i32
    return %c0_i32, %c0_i32_0 : i32, i32
  }
  func.func @transform_1(%arg0: i32, %arg1: i32) -> (i32, i32) {
    %c0_i32 = arith.constant 0 : i32
    %c0_i32_0 = arith.constant 0 : i32
    return %arg0, %c0_i32 : i32, i32
  }
  func.func @transform_2(%arg0: i32, %arg1: i32) -> (i32, i32) {
    %c0_i32 = arith.constant 0 : i32
    %c0_i32_0 = arith.constant 0 : i32
    return %c0_i32, %arg1 : i32, i32
  }
  func.func @transform_3(%arg0: i32, %arg1: i32) -> (i32, i32) {
    %c0_i32 = arith.constant 0 : i32
    %c0_i32_0 = arith.constant 0 : i32
    return %arg0, %c0_i32 : i32, i32
  }
}

</mosaic_0001>

<llo_original>
// kernel: tpu_custom_call.1
$region0: #{tpu_custom_call.1}
  #allocation0 [shape = 'u32[]', space=smem, size = 0x4, offset = 0x4, fixed_abs, tag = 'smem constant byte address 0x4 - core index']
  #allocation1 [shape = 'u32[144,128]{1,0:T(1,128)}', space=vmem, size = 0x12000, scoped, tag = 'internal scratch']
  #allocation2 [shape = 'f32[8,1]{1,0:T(8,128)}', space=vmem, size = 0x1000, scoped, tag = 'scratch operand']
  #allocation3 [shape = 'f32[8,1]{1,0:T(8,128)}', space=vmem, size = 0x1000, scoped, tag = 'scratch operand']
  #allocation4 [shape = 'f32[1,1]{1,0:T(1,128)S(6)}', space=smem, size = 0x200, scoped, tag = 'scoped memory for tpu_custom_call.1']
  %s0 = inlined_call_operand.<no memory space> [shape: f32[1,1], index: 0, kind: input, shape index: {}]
  %s1 = inlined_call_operand.vmem [shape: f32[8,1], index: 1, kind: input, shape index: {}]
  %s2 = inlined_call_operand.vmem [shape: f32[1,128], index: 2, kind: input, shape index: {}]
  %s3 = inlined_call_operand.hbm [shape: f32[8,128], index: 3, kind: output, shape index: {}]
  %s4 = sld [smem:[#allocation0]]
  $region30: #{tpu_custom_call.1} parent=0
    _
  %s6 = ssub.s32 1, %s4
  %s7 = scalar_select 0, %s6, %s4
  %8 = sst [smem:[#allocation4]] %s0
  $region1: #{tpu_custom_call.1} parent=0
    #allocation5 [shape = 'u8[4096]{0}', space=vmem, size = 0x1000, scoped, tag = 'output window, operand 0, single buffered']
    #allocation6 [shape = 's32[1]{0}', space=sflag, size = 0x4, scoped, tag = 'scoped memory for tpu_custom_call.1']
    %9 = vsyncpa [#allocation6], 0
    // Predicated region
    $region2: #{tpu_custom_call.1} parent=1 // pred_check
      _
    $region3: #{tpu_custom_call.1} parent=1 // pred_check_branch
      %11 = sbr.rel (0) target = $region5
    $region4: #{tpu_custom_call.1} parent=1 // pred_region
      _
    $region5: #{tpu_custom_call.1} parent=1 // pred_fallthru
      _
    // Predicated region
    $region6: #{tpu_custom_call.1} parent=1 // pred_check
      _
    $region7: #{tpu_custom_call.1} parent=1 // pred_check_branch
      %13 = sbr.rel (0) target = $region9
    $region8: #{tpu_custom_call.1} parent=1 // pred_region
      _
    $region9: #{tpu_custom_call.1} parent=1 // pred_fallthru
      _
    // Predicated region
    $region10: #{tpu_custom_call.1} parent=1 // pred_check
      _
    $region11: #{tpu_custom_call.1} parent=1 // pred_check_branch
      %15 = sbr.rel (0) target = $region13
    $region12: #{tpu_custom_call.1} parent=1 // pred_region
      _
    $region13: #{tpu_custom_call.1} parent=1 // pred_fallthru
      _
    %p16 = scmp.eq.s32.totalorder 0, 0
    // Predicated region
    $region14: #{tpu_custom_call.1} parent=1 // pred_check
      %p17 = pneg %p16
    $region15: #{tpu_custom_call.1} parent=1 // pred_check_branch
      %19 = sbr.rel (%p17) target = $region17
    $region16: #{tpu_custom_call.1} parent=1 // pred_region
      %vm20 = vcmask 7168
      %21 = vst.msk [vmem:[#allocation2] sm:$0xff] %vm20, -inf
      %22 = vst.msk [vmem:[#allocation3] sm:$0xff] %vm20, 0.0
    $region17: #{tpu_custom_call.1} parent=1 // pred_fallthru
      _
    %s23 = sld [smem:[#allocation4]]
    %v24 = vld [vmem:[%s1] sm:$0xff]
    %v25 = vld [vmem:[%s2] sm:$0x1]
    %27 = vset.pattern.permute.xlu0 0
    %28 = vperm.xlu0 %27, %v24
    %v29 = vpop.permute.xlu0 %28
    %v32 = vlaneseq
    %v33 = vshrl.u32 %v32, 7
    %v34 = vsub.s32 0, %v33
    %v35 = vrot.slane %v25, %v34
    %v37 = vsub.f32 %v29, %v35
    %v38 = vmul.f32 %v37, %v37
    %v39 = vstv %s23
    %v40 = vmul.f32 %v38, %v39
    %v41 = vlaneseq
    %v42 = vand.u32 %v41, 127
    %s43 = smul.u32 0, 128
    %v44 = vstv %s43
    %v45 = vadd.s32 %v42, %v44
    %vm46 = vcmp.lt.s32.totalorder %v45, 8
    %v47 = vsel %vm46, %v40, -inf
    %v48 = vld [vmem:[#allocation2] sm:$0xff]
    %49 = vmax.xlane.f32.xlu0 %v47
    %v50 = vpop.xlane.xlu0 %49
    %v51 = vmax.f32 %v48, %v50
    %v52 = vsub.f32 %v48, %v51
    %v53 = vmul.f32 %v52, 1.442695
    %v54 = vpow.pop %v53
    %v55 = vld [vmem:[#allocation3] sm:$0xff]
    %v56 = vmul.f32 %v54, %v55
    %58 = vset.pattern.permute.xlu0 0
    %59 = vperm.xlu0 %58, %v51
    %v60 = vpop.permute.xlu0 %59
    %v62 = vsub.f32 %v47, %v60
    %v63 = vmul.f32 %v62, 1.442695
    %v64 = vpow.pop %v63
    %65 = vadd.xlane.f32.xlu0 %v64
    %v66 = vpop.xlane.xlu0 %65
    %v67 = vadd.f32 %v56, %v66
    %vm68 = vcmask 7168
    %69 = vst.msk [vmem:[#allocation3] sm:$0xff] %vm68, %v67
    %70 = vst.msk [vmem:[#allocation2] sm:$0xff] %vm68, %v51
    // Predicated region
    $region18: #{tpu_custom_call.1} parent=1 // pred_check
      %p71 = pneg %p16
    $region19: #{tpu_custom_call.1} parent=1 // pred_check_branch
      %73 = sbr.rel (%p71) target = $region21
    $region20: #{tpu_custom_call.1} parent=1 // pred_region
      %v74 = vld [vmem:[#allocation2] sm:$0xff]
      %v75 = vld [vmem:[#allocation3] sm:$0xff]
      %v76 = vlog2.pop %v75
      %v77 = vmul.f32 %v76, 0.6931472
      %v78 = vadd.f32 %v74, %v77
      %80 = vset.pattern.permute.xlu0 0
      %81 = vperm.xlu0 %80, %v78
      %v82 = vpop.permute.xlu0 %81
      %84 = vst [vmem:[#allocation5] sm:$0xff] %v82
    $region21: #{tpu_custom_call.1} parent=1 // pred_fallthru
      _
    // Predicated region
    $region22: #{tpu_custom_call.1} parent=1 // pred_check
      _
    $region23: #{tpu_custom_call.1} parent=1 // pred_check_branch
      %86 = sbr.rel (0) target = $region25
    $region24: #{tpu_custom_call.1} parent=1 // pred_region
      %s88 = ssub.s32 128, 128
      %89 = vsyncadd [#allocation6], %s88
      %s91 = sshll.u32 [#allocation5], 4
      %s92 = int_to_ptr.vmem [resolvable:$true] %s91
      %94 = dma.vmem_to_hbm [thread:$0]  %s92, 128, %s3, [#allocation6]
    $region25: #{tpu_custom_call.1} parent=1 // pred_fallthru
      _
    // Predicated region
    $region26: #{tpu_custom_call.1} parent=1 // pred_check
      _
    $region27: #{tpu_custom_call.1} parent=1 // pred_check_branch
      %96 = sbr.rel (0) target = $region29
    $region28: #{tpu_custom_call.1} parent=1 // pred_region
      %97 = dma.done [#allocation6], 128
    $region29: #{tpu_custom_call.1} parent=1 // pred_fallthru
      _
    %98 = vsyncpa [#allocation6], 1

</llo_original>
